<compile_context>
chip_gen: v6e
topology: v6e:2x2x1
jax: 0.10.0
libtpu: 0.0.40
codegen_flags: <defaults>
</compile_context>

<pallas_src>
from typing import NamedTuple

import jax
import jax.numpy as jnp
from jax.experimental import pallas as pl
from jax.experimental.pallas import tpu as pltpu

HIDDEN = 128


def policy_kernel(x_ref, w1_ref, b1_ref, w2_ref, b2_ref, out_ref):
    # x arrives as f32; cast to bf16 in-kernel (VPU slot has slack) so the
    # wrapper never materializes a separate bf16 copy of x in HBM.
    x = x_ref[...].astype(jnp.bfloat16)

    # fc1: bf16 operands on the MXU, f32 accumulation; bias + ReLU in f32
    # (keep elementwise math in f32 — v5e's VPU has no bf16).
    h = jnp.dot(x, w1_ref[...], preferred_element_type=jnp.float32)
    h = jnp.maximum(h + b1_ref[...], 0.0)

    # Output layer on the lane-padded width. Padded columns have zero weights
    # and a -1e30 bias (kept f32 end-to-end — casting b2 to bf16 would turn it
    # into -inf), so exp(logit - m) underflows to exactly 0 for them and the
    # softmax over the real columns is unchanged.
    logits = jnp.dot(h.astype(jnp.bfloat16), w2_ref[...],
                     preferred_element_type=jnp.float32)
    logits = logits + b2_ref[...]

    # Numerically-stable softmax along the (padded, lane-dense) last dim.
    m = jnp.max(logits, axis=-1, keepdims=True)
    e = jnp.exp(logits - m)
    denom = jnp.sum(e, axis=-1, keepdims=True)
    inv = pl.reciprocal(denom, approx=False)   # EUP; exact normalization
    out_ref[...] = (e * inv).astype(out_ref.dtype)

    # TODO(synk): Policy.action's Categorical sampling could be fused here via
    # pltpu.prng_seed + pltpu.prng_random_bits (Gumbel-max over the padded
    # logits, pad columns already at -1e30), returning (B,1) action + log-prob
    # and shrinking writeback ~64x; kept out to preserve forward() semantics.


class PolicyParams(NamedTuple):
    """Prepared (padded / casted) weights — build once, reuse every step."""
    w1: jax.Array   # (n_in, 128)        bf16
    b1: jax.Array   # (1, 128)           f32
    w2: jax.Array   # (128, n_out_pad)   bf16, pad columns = 0
    b2: jax.Array   # (1, n_out_pad)     f32,  pad columns = -1e30 (MUST stay f32)
    n_out: int


def prepare_params(w1, b1, w2, b2) -> PolicyParams:
    """One-time weight prep, hoisted out of the per-step forward so an RL step
    loop doesn't re-materialize padded/casted weight copies on every call."""
    n_in, hidden = w1.shape
    assert hidden == HIDDEN
    hidden2, n_out = w2.shape
    assert hidden2 == hidden and b1.shape == (1, hidden) and b2.shape == (1, n_out)

    n_out_pad = max(128, ((n_out + 127) // 128) * 128)   # lane-dense output width
    w2p = jnp.zeros((hidden, n_out_pad), jnp.float32).at[:, :n_out].set(
        w2.astype(jnp.float32))
    b2p = jnp.full((1, n_out_pad), -1e30, jnp.float32).at[:, :n_out].set(
        b2.astype(jnp.float32))
    return PolicyParams(
        w1=w1.astype(jnp.bfloat16),
        b1=b1.astype(jnp.float32),
        w2=w2p.astype(jnp.bfloat16),
        b2=b2p,                       # deliberately f32 — see kernel comment
        n_out=int(n_out),
    )


def policy_forward(x, params: PolicyParams, *, batch_tile=1024, min_split=256,
                   out_dtype=jnp.float32):
    """x: (B, n_input) f32. Returns (B, n_output) probabilities in `out_dtype`.
    (Pass out_dtype=jnp.bfloat16 to halve output writeback, e.g. on v5e.)"""
    B, n_in = x.shape
    hidden = HIDDEN
    n_out_pad = params.w2.shape[1]
    n_out = params.n_out
    assert params.w1.shape == (n_in, hidden)

    x = x.astype(jnp.float32)

    # --- batch tiling --------------------------------------------------------
    # Small batch: one full-batch tile (no per-step overhead).
    # Large batch: an even number (>=2) of tiles, each <= batch_tile, so the
    # "parallel" batch axis shards evenly across v7x's two TensorCores while
    # amortizing the ~0.35us per-grid-step overhead. No padding of x: the
    # ragged last block is masked by Pallas (OOB output rows are discarded;
    # garbage input rows are row-local and never returned).
    if B <= min_split:
        tb = B
    else:
        n_tiles = max(2, pl.cdiv(B, batch_tile))
        if n_tiles % 2:
            n_tiles += 1
        tb = ((pl.cdiv(B, n_tiles) + 7) // 8) * 8   # sublane-align the tile
    grid = (pl.cdiv(B, tb),)

    cost = pl.CostEstimate(
        flops=2 * B * (n_in * hidden + hidden * n_out_pad),
        transcendentals=B * (n_out_pad + 1),          # exp + reciprocal
        bytes_accessed=(x.size * 4 + params.w1.size * 2 + params.w2.size * 2
                        + params.b1.size * 4 + params.b2.size * 4
                        + B * n_out_pad * jnp.dtype(out_dtype).itemsize),
    )

    out = pl.pallas_call(
        policy_kernel,
        out_shape=jax.ShapeDtypeStruct((B, n_out_pad), out_dtype),
        grid=grid,
        in_specs=[
            pl.BlockSpec((tb, n_in), lambda i: (i, 0)),           # x tiles
            pl.BlockSpec((n_in, hidden), lambda i: (0, 0)),       # w1 resident
            pl.BlockSpec((1, hidden), lambda i: (0, 0)),          # b1 resident
            pl.BlockSpec((hidden, n_out_pad), lambda i: (0, 0)),  # w2 resident
            pl.BlockSpec((1, n_out_pad), lambda i: (0, 0)),       # b2 resident
        ],
        out_specs=pl.BlockSpec((tb, n_out_pad), lambda i: (i, 0)),
        compiler_params=pltpu.CompilerParams(
            dimension_semantics=("parallel",)),
        cost_estimate=cost,
    )(x, params.w1, params.b1, params.w2, params.b2)

    return out[:, :n_out]   # rows are already exactly B; drop lane padding


def init_params(key, n_input, n_output, hidden=HIDDEN):
    """Deterministic init matching nn.Linear's U(-1/sqrt(fan_in), +1/sqrt(fan_in)).
    Weights stored pre-transposed as (in, out) so the kernel does plain x @ W."""
    k1, k2, k3, k4 = jax.random.split(key, 4)
    lim1 = 1.0 / jnp.sqrt(jnp.float32(n_input))
    lim2 = 1.0 / jnp.sqrt(jnp.float32(hidden))
    w1 = jax.random.uniform(k1, (n_input, hidden), jnp.float32, -lim1, lim1)
    b1 = jax.random.uniform(k2, (1, hidden), jnp.float32, -lim1, lim1)
    w2 = jax.random.uniform(k3, (hidden, n_output), jnp.float32, -lim2, lim2)
    b2 = jax.random.uniform(k4, (1, n_output), jnp.float32, -lim2, lim2)
    return w1, b1, w2, b2


def policy_reference(x, w1, b1, w2, b2):
    """Pure-JAX reference following the same bf16-matmul / f32-math path."""
    h = jnp.dot(x.astype(jnp.bfloat16), w1.astype(jnp.bfloat16),
                preferred_element_type=jnp.float32) + b1
    h = jnp.maximum(h, 0.0)
    logits = jnp.dot(h.astype(jnp.bfloat16), w2.astype(jnp.bfloat16),
                     preferred_element_type=jnp.float32) + b2
    return jax.nn.softmax(logits, axis=-1)


# TODO(synk): Policy.action (Categorical sampling / log_prob on host) and
# Policy.train_policy (optimizer + backward) are host/training logic, not part
# of the forward kernel.

if __name__ == "__main__":
    key = jax.random.PRNGKey(0)
    n_input, n_output = 32, 4

    kx, kp, kx2 = jax.random.split(key, 3)
    w1, b1, w2, b2 = init_params(kp, n_input, n_output)
    params = prepare_params(w1, b1, w2, b2)   # one-time weight prep (hoisted)

    # Small per-step shape implied by the module (B=2 states of 32 features):
    # single-tile fast path.
    x_small = jax.random.normal(kx, (2, n_input), jnp.float32)
    probs_small = jax.block_until_ready(policy_forward(x_small, params))

    # Batched path exercising the grid: B=600 -> 2 tiles of 304 rows (even
    # grid for v7x's two TCs) with a ragged, Pallas-masked last block.
    x_big = jax.random.normal(kx2, (600, n_input), jnp.float32)
    probs_big = jax.block_until_ready(policy_forward(x_big, params))

    for x_chk, probs in ((x_small, probs_small), (x_big, probs_big)):
        ref = policy_reference(x_chk, w1, b1, w2, b2)
        assert probs.shape == (x_chk.shape[0], n_output)
        assert jnp.allclose(probs, ref, atol=5e-3), "mismatch vs bf16 reference"
        assert jnp.allclose(jnp.sum(probs, axis=-1), 1.0, atol=1e-3)

    # loose semantic sanity vs a pure-f32 reference
    h_f32 = jnp.maximum(x_small @ w1 + b1, 0.0)
    probs_f32 = jax.nn.softmax(h_f32 @ w2 + b2, axis=-1)
    assert jnp.allclose(probs_small, probs_f32, atol=5e-2)

    print("KERNEL_OK")
</pallas_src>

<mosaic_0001>
module attributes {stable_mosaic.version = 11 : i64} {
  func.func @policy_kernel(%arg0: i32, %arg1: memref<2x32xf32, #tpu.memory_space<vmem>>, %arg2: memref<32x128xbf16, #tpu.memory_space<vmem>>, %arg3: memref<1x128xf32, #tpu.memory_space<vmem>>, %arg4: memref<128x128xbf16, #tpu.memory_space<vmem>>, %arg5: memref<1x128xf32, #tpu.memory_space<vmem>>, %arg6: memref<2x128xf32, #tpu.memory_space<vmem>>) attributes {dimension_semantics = [#tpu.dimension_semantics<parallel>], iteration_bounds = array<i64: 1>, scalar_prefetch = 0 : i64, scratch_operands = 0 : i64, tpu.core_type = #tpu.core_type<tc>, window_params = [{transform_indices = @transform_0, window_bounds = array<i64: 2, 32>}, {pipeline_mode = #tpu.pipeline_mode<synchronous>, transform_indices = @transform_1, window_bounds = array<i64: 32, 128>}, {pipeline_mode = #tpu.pipeline_mode<synchronous>, transform_indices = @transform_2, window_bounds = array<i64: 1, 128>}, {pipeline_mode = #tpu.pipeline_mode<synchronous>, transform_indices = @transform_3, window_bounds = array<i64: 128, 128>}, {pipeline_mode = #tpu.pipeline_mode<synchronous>, transform_indices = @transform_4, window_bounds = array<i64: 1, 128>}, {transform_indices = @transform_5, window_bounds = array<i64: 2, 128>}]} {
    %c0 = arith.constant 0 : index
    %c0_0 = arith.constant 0 : index
    %0 = vector.load %arg1[%c0, %c0_0] : memref<2x32xf32, #tpu.memory_space<vmem>>, vector<2x32xf32>
    %1 = arith.truncf %0 : vector<2x32xf32> to vector<2x32xbf16>
    %c0_1 = arith.constant 0 : index
    %c0_2 = arith.constant 0 : index
    %2 = vector.load %arg2[%c0_1, %c0_2] : memref<32x128xbf16, #tpu.memory_space<vmem>>, vector<32x128xbf16>
    %cst = arith.constant dense<0.000000e+00> : vector<2x128xf32>
    %3 = tpu.matmul %1, %2, %cst {dimension_numbers = #tpu.dot_dimension_numbers<[1], [0], [0], [1], [0, 0, 1, 1], [], []>} : vector<2x32xbf16>, vector<32x128xbf16>, vector<2x128xf32> -> vector<2x128xf32>
    %c0_3 = arith.constant 0 : index
    %c0_4 = arith.constant 0 : index
    %4 = vector.load %arg3[%c0_3, %c0_4] : memref<1x128xf32, #tpu.memory_space<vmem>>, vector<1x128xf32>
    %5 = vector.broadcast %4 : vector<1x128xf32> to vector<2x128xf32>
    %6 = arith.addf %3, %5 : vector<2x128xf32>
    %cst_5 = arith.constant 0.000000e+00 : f32
    %7 = vector.broadcast %cst_5 : f32 to vector<2x128xf32>
    %8 = arith.maximumf %6, %7 : vector<2x128xf32>
    %9 = arith.truncf %8 : vector<2x128xf32> to vector<2x128xbf16>
    %c0_6 = arith.constant 0 : index
    %c0_7 = arith.constant 0 : index
    %10 = vector.load %arg4[%c0_6, %c0_7] : memref<128x128xbf16, #tpu.memory_space<vmem>>, vector<128x128xbf16>
    %cst_8 = arith.constant dense<0.000000e+00> : vector<2x128xf32>
    %11 = tpu.matmul %9, %10, %cst_8 {dimension_numbers = #tpu.dot_dimension_numbers<[1], [0], [0], [1], [0, 0, 1, 1], [], []>} : vector<2x128xbf16>, vector<128x128xbf16>, vector<2x128xf32> -> vector<2x128xf32>
    %c0_9 = arith.constant 0 : index
    %c0_10 = arith.constant 0 : index
    %12 = vector.load %arg5[%c0_9, %c0_10] : memref<1x128xf32, #tpu.memory_space<vmem>>, vector<1x128xf32>
    %13 = vector.broadcast %12 : vector<1x128xf32> to vector<2x128xf32>
    %14 = arith.addf %11, %13 : vector<2x128xf32>
    %cst_11 = arith.constant dense<0xFF800000> : vector<2xf32>
    %15 = vector.multi_reduction <maximumf>, %14, %cst_11 [1] : vector<2x128xf32> to vector<2xf32>
    %16 = vector.shape_cast %15 : vector<2xf32> to vector<2x1xf32>
    %17 = vector.broadcast %16 : vector<2x1xf32> to vector<2x128xf32>
    %18 = arith.subf %14, %17 : vector<2x128xf32>
    %19 = math.exp %18 : vector<2x128xf32>
    %cst_12 = arith.constant dense<0.000000e+00> : vector<2xf32>
    %20 = vector.multi_reduction <add>, %19, %cst_12 [1] : vector<2x128xf32> to vector<2xf32>
    %21 = vector.shape_cast %20 : vector<2xf32> to vector<2x1xf32>
    %22 = tpu.reciprocal %21 : vector<2x1xf32> -> vector<2x1xf32>
    %23 = vector.broadcast %22 : vector<2x1xf32> to vector<2x128xf32>
    %24 = arith.mulf %19, %23 : vector<2x128xf32>
    %c0_13 = arith.constant 0 : index
    %c0_14 = arith.constant 0 : index
    %25 = vector.load %arg6[%c0_13, %c0_14] : memref<2x128xf32, #tpu.memory_space<vmem>>, vector<2x128xf32>
    tpu.vector_store %arg6[%c0_13, %c0_14], %24 {strides = array<i32>} : memref<2x128xf32, #tpu.memory_space<vmem>>, vector<2x128xf32>,
    return
  }
  func.func @transform_0(%arg0: i32) -> (i32, i32) {
    %c0_i32 = arith.constant 0 : i32
    %c0_i32_0 = arith.constant 0 : i32
    return %arg0, %c0_i32 : i32, i32
  }
  func.func @transform_1(%arg0: i32) -> (i32, i32) {
    %c0_i32 = arith.constant 0 : i32
    %c0_i32_0 = arith.constant 0 : i32
    %c0_i32_1 = arith.constant 0 : i32
    return %c0_i32, %c0_i32_0 : i32, i32
  }
  func.func @transform_2(%arg0: i32) -> (i32, i32) {
    %c0_i32 = arith.constant 0 : i32
    %c0_i32_0 = arith.constant 0 : i32
    %c0_i32_1 = arith.constant 0 : i32
    return %c0_i32, %c0_i32_0 : i32, i32
  }
  func.func @transform_3(%arg0: i32) -> (i32, i32) {
    %c0_i32 = arith.constant 0 : i32
    %c0_i32_0 = arith.constant 0 : i32
    %c0_i32_1 = arith.constant 0 : i32
    return %c0_i32, %c0_i32_0 : i32, i32
  }
  func.func @transform_4(%arg0: i32) -> (i32, i32) {
    %c0_i32 = arith.constant 0 : i32
    %c0_i32_0 = arith.constant 0 : i32
    %c0_i32_1 = arith.constant 0 : i32
    return %c0_i32, %c0_i32_0 : i32, i32
  }
  func.func @transform_5(%arg0: i32) -> (i32, i32) {
    %c0_i32 = arith.constant 0 : i32
    %c0_i32_0 = arith.constant 0 : i32
    return %arg0, %c0_i32 : i32, i32
  }
}

</mosaic_0001>

<llo_original>
// kernel: tpu_custom_call.1
$region0: #{tpu_custom_call.1}
  #allocation0 [shape = 'u32[]', space=smem, size = 0x4, offset = 0x4, fixed_abs, tag = 'smem constant byte address 0x4 - core index']
  #allocation1 [shape = 'u32[144,128]{1,0:T(1,128)}', space=vmem, size = 0x12000, scoped, tag = 'internal scratch']
  %s0 = inlined_call_operand.hbm [shape: f32[2,32], index: 0, kind: input, shape index: {}]
  %s1 = inlined_call_operand.hbm [shape: bf16[32,128], index: 1, kind: input, shape index: {}]
  %s2 = inlined_call_operand.vmem [shape: f32[1,128], index: 2, kind: input, shape index: {}]
  %s3 = inlined_call_operand.hbm [shape: bf16[128,128], index: 3, kind: input, shape index: {}]
  %s4 = inlined_call_operand.vmem [shape: f32[1,128], index: 4, kind: input, shape index: {}]
  %s5 = inlined_call_operand.hbm [shape: f32[2,128], index: 5, kind: output, shape index: {}]
  %s6 = sld [smem:[#allocation0]]
  $region42: #{tpu_custom_call.1} parent=0
    _
  %s8 = ssub.s32 1, %s6
  %s9 = scalar_select 0, %s8, %s6
  $region1: #{tpu_custom_call.1} parent=0
    #allocation2 [shape = 'u8[1024]{0}', space=vmem, size = 0x400, scoped, tag = 'input window, operand 0, single buffered']
    #allocation3 [shape = 's32[1]{0}', space=sflag, size = 0x4, scoped, tag = 'scoped memory for tpu_custom_call.1']
    #allocation4 [shape = 's32[1]{0}', space=sflag, size = 0x4, scoped, tag = 'scoped memory for tpu_custom_call.1']
    #allocation5 [shape = 'u8[8192]{0}', space=vmem, size = 0x2000, scoped, tag = 'input window, operand 1, single buffered']
    #allocation6 [shape = 's32[1]{0}', space=sflag, size = 0x4, scoped, tag = 'scoped memory for tpu_custom_call.1']
    #allocation7 [shape = 'u8[32768]{0}', space=vmem, size = 0x8000, scoped, tag = 'input window, operand 3, single buffered']
    #allocation8 [shape = 'u8[1024]{0}', space=vmem, size = 0x400, scoped, tag = 'output window, operand 0, single buffered']
    %10 = vsyncpa [#allocation3], 0
    %11 = vsyncpa [#allocation6], 0
    %12 = vsyncpa [#allocation4], 0
    // Predicated region
    $region2: #{tpu_custom_call.1} parent=1 // pred_check
      _
    $region3: #{tpu_custom_call.1} parent=1 // pred_check_branch
      %14 = sbr.rel (0) target = $region5
    $region4: #{tpu_custom_call.1} parent=1 // pred_region
      %s16 = ssub.s32 32, 32
      %17 = vsyncadd [#allocation3], %s16
      %s19 = sshll.u32 [#allocation2], 4
      %s20 = int_to_ptr.vmem [resolvable:$true] %s19
      %22 = dma.hbm_to_vmem [thread:$0]  %s0, 32, %s20, [#allocation3]
    $region5: #{tpu_custom_call.1} parent=1 // pred_fallthru
      _
    // Predicated region
    $region6: #{tpu_custom_call.1} parent=1 // pred_check
      _
    $region7: #{tpu_custom_call.1} parent=1 // pred_check_branch
      %24 = sbr.rel (0) target = $region9
    $region8: #{tpu_custom_call.1} parent=1 // pred_region
      %s26 = ssub.s32 256, 256
      %27 = vsyncadd [#allocation6], %s26
      %s28 = sshll.u32 [#allocation5], 4
      %s29 = int_to_ptr.vmem [resolvable:$true] %s28
      %34 = dma.hbm_to_vmem [thread:$0]  %s1, 256, %s29, [#allocation6], 64, 64, 4
    $region9: #{tpu_custom_call.1} parent=1 // pred_fallthru
      _
    // Predicated region
    $region10: #{tpu_custom_call.1} parent=1 // pred_check
      _
    $region11: #{tpu_custom_call.1} parent=1 // pred_check_branch
      %36 = sbr.rel (0) target = $region13
    $region12: #{tpu_custom_call.1} parent=1 // pred_region
      _
    $region13: #{tpu_custom_call.1} parent=1 // pred_fallthru
      _
    // Predicated region
    $region14: #{tpu_custom_call.1} parent=1 // pred_check
      _
    $region15: #{tpu_custom_call.1} parent=1 // pred_check_branch
      %38 = sbr.rel (0) target = $region17
    $region16: #{tpu_custom_call.1} parent=1 // pred_region
      %s40 = ssub.s32 1024, 1024
      %41 = vsyncadd [#allocation6], %s40
      %s42 = sshll.u32 [#allocation7], 4
      %s43 = int_to_ptr.vmem [resolvable:$true] %s42
      %48 = dma.hbm_to_vmem [thread:$0]  %s3, 1024, %s43, [#allocation6], 64, 64, 4
    $region17: #{tpu_custom_call.1} parent=1 // pred_fallthru
      _
    // Predicated region
    $region18: #{tpu_custom_call.1} parent=1 // pred_check
      _
    $region19: #{tpu_custom_call.1} parent=1 // pred_check_branch
      %50 = sbr.rel (0) target = $region21
    $region20: #{tpu_custom_call.1} parent=1 // pred_region
      _
    $region21: #{tpu_custom_call.1} parent=1 // pred_fallthru
      _
    // Predicated region
    $region22: #{tpu_custom_call.1} parent=1 // pred_check
      _
    $region23: #{tpu_custom_call.1} parent=1 // pred_check_branch
      %52 = sbr.rel (0) target = $region25
    $region24: #{tpu_custom_call.1} parent=1 // pred_region
      %53 = dma.done [#allocation3], 32
    $region25: #{tpu_custom_call.1} parent=1 // pred_fallthru
      _
    // Predicated region
    $region26: #{tpu_custom_call.1} parent=1 // pred_check
      _
    $region27: #{tpu_custom_call.1} parent=1 // pred_check_branch
      %55 = sbr.rel (0) target = $region29
    $region28: #{tpu_custom_call.1} parent=1 // pred_region
      %56 = dma.done [#allocation6], 256
    $region29: #{tpu_custom_call.1} parent=1 // pred_fallthru
      _
    // Predicated region
    $region30: #{tpu_custom_call.1} parent=1 // pred_check
      _
    $region31: #{tpu_custom_call.1} parent=1 // pred_check_branch
      %58 = sbr.rel (0) target = $region33
    $region32: #{tpu_custom_call.1} parent=1 // pred_region
      %59 = dma.done [#allocation6], 1024
    $region33: #{tpu_custom_call.1} parent=1 // pred_fallthru
      _
    %v61 = vld [vmem:[#allocation2] sm:$0x3]
    %v62 = vpack.c.bf16 %v61, %v61
    %v63 = vld [vmem:[#allocation5] sm:$0xf]
    %v64 = vld [vmem:[#allocation5 + $0x4] sm:$0xf]
    %v65 = vld [vmem:[#allocation5 + $0x8] sm:$0xf]
    %v66 = vld [vmem:[#allocation5 + $0xc] sm:$0xf]
    %v67 = vld [vmem:[%s2] sm:$0x1]
    %v69 = vlaneseq
    %v70 = vshrl.u32 %v69, 7
    %v71 = vsub.s32 0, %v70
    %v72 = vrot.slane %v67, %v71
    %v78 = vunpack.c.l.b16 %v63
    %v79 = vunpack.c.l.b16 %v64
    %v80 = vunpack.c.l.b16 %v65
    %v81 = vunpack.c.l.b16 %v66
    %v82 = vpack.c.b16 %v79, %v78
    %v83 = vpack.c.b16 %v81, %v80
    %vm86 = vcmask 261120
    %v88 = vsel %vm86, %v62, 0
    %90 = vmatprep.subr.bf16.mxu0 0
    %91 = vmatpush1.bf16.msra.mxu0 0
    %92 = vmatprep.subr.bf16.mxu0 0
    %93 = vmatpush1.bf16.msra.mxu0 0
    %94 = vmatprep.subr.bf16.mxu0 0
    %95 = vmatpush1.bf16.msra.mxu0 0
    %96 = vmatprep.subr.bf16.mxu0 0
    %97 = vmatpush1.bf16.msra.mxu0 0
    %98 = vmatprep.subr.bf16.mxu0 0
    %99 = vmatpush1.bf16.msra.mxu0 0
    %100 = vmatprep.subr.bf16.mxu0 0
    %101 = vmatpush1.bf16.msra.mxu0 0
    %102 = vmatprep.subr.bf16.mxu0 0
    %103 = vmatpush1.bf16.msra.mxu0 %v83
    %104 = vmatprep.subr.bf16.mxu0 0
    %105 = vmatpush1.bf16.msra.mxu0 %v82
    %106 = vmatprep.subr.bf16.mxu0 0
    %107 = vmatpush2.bf16.msra.mxu0 0
    %108 = vmatprep.subr.bf16.mxu0 0
    %109 = vmatpush2.bf16.msra.mxu0 0
    %110 = vmatprep.subr.bf16.mxu0 0
    %111 = vmatpush2.bf16.msra.mxu0 0
    %112 = vmatprep.subr.bf16.mxu0 0
    %113 = vmatpush2.bf16.msra.mxu0 0
    %114 = vmatprep.subr.bf16.mxu0 0
    %115 = vmatpush2.bf16.msra.mxu0 0
    %116 = vmatprep.subr.bf16.mxu0 0
    %117 = vmatpush2.bf16.msra.mxu0 0
    %118 = vmatprep.subr.bf16.mxu0 0
    %119 = vmatpush2.bf16.msra.mxu0 0
    %120 = vmatprep.subr.bf16.mxu0 0
    %121 = vmatpush2.bf16.msra.mxu0 0
    %122 = vmatprep.mubr.bf16.mxu0 0
    %123 = vmatmul.mubr.bf16.gmra.mxu0 %v88
    %v124 = vpop.f32.mrf.mxu0
    %v125 = vadd.f32 %v72, %v124
    %v126 = vpop.f32.mrf.mxu0
    %v127 = vpop.f32.mrf.mxu0
    %v128 = vpop.f32.mrf.mxu0
    %129 = vdwg.mxu0
    %v130 = vmax.f32 %v125, 0.0
    %v131 = vpack.c.bf16 %v130, %v130
    %v132 = vld [vmem:[#allocation7] sm:$0xf]
    %v133 = vld [vmem:[#allocation7 + $0x4] sm:$0xf]
    %v134 = vld [vmem:[#allocation7 + $0x8] sm:$0xf]
    %v135 = vld [vmem:[#allocation7 + $0xc] sm:$0xf]
    %v136 = vld [vmem:[#allocation7 + $0x10] sm:$0xf]
    %v137 = vld [vmem:[#allocation7 + $0x14] sm:$0xf]
    %v138 = vld [vmem:[#allocation7 + $0x18] sm:$0xf]
    %v139 = vld [vmem:[#allocation7 + $0x1c] sm:$0xf]
    %v140 = vld [vmem:[#allocation7 + $0x20] sm:$0xf]
    %v141 = vld [vmem:[#allocation7 + $0x24] sm:$0xf]
    %v142 = vld [vmem:[#allocation7 + $0x28] sm:$0xf]
    %v143 = vld [vmem:[#allocation7 + $0x2c] sm:$0xf]
    %v144 = vld [vmem:[#allocation7 + $0x30] sm:$0xf]
    %v145 = vld [vmem:[#allocation7 + $0x34] sm:$0xf]
    %v146 = vld [vmem:[#allocation7 + $0x38] sm:$0xf]
    %v147 = vld [vmem:[#allocation7 + $0x3c] sm:$0xf]
    %v148 = vld [vmem:[%s4] sm:$0x1]
    %v150 = vlaneseq
    %v151 = vshrl.u32 %v150, 7
    %v152 = vsub.s32 0, %v151
    %v153 = vrot.slane %v148, %v152
    %v171 = vunpack.c.l.b16 %v132
    %v172 = vunpack.c.l.b16 %v133
    %v173 = vunpack.c.l.b16 %v134
    %v174 = vunpack.c.l.b16 %v135
    %v175 = vunpack.c.l.b16 %v136
    %v176 = vunpack.c.l.b16 %v137
    %v177 = vunpack.c.l.b16 %v138
    %v178 = vunpack.c.l.b16 %v139
    %v179 = vunpack.c.l.b16 %v140
    %v180 = vunpack.c.l.b16 %v141
    %v181 = vunpack.c.l.b16 %v142
    %v182 = vunpack.c.l.b16 %v143
    %v183 = vunpack.c.l.b16 %v144
    %v184 = vunpack.c.l.b16 %v145
    %v185 = vunpack.c.l.b16 %v146
    %v186 = vunpack.c.l.b16 %v147
    %v187 = vpack.c.b16 %v172, %v171
    %v188 = vpack.c.b16 %v174, %v173
    %v189 = vpack.c.b16 %v176, %v175
    %v190 = vpack.c.b16 %v178, %v177
    %v191 = vpack.c.b16 %v180, %v179
    %v192 = vpack.c.b16 %v182, %v181
    %v193 = vpack.c.b16 %v184, %v183
    %v194 = vpack.c.b16 %v186, %v185
    %203 = vmatprep.subr.bf16.mxu0 0
    %204 = vmatpush1.bf16.msra.mxu0 %v194
    %205 = vmatprep.subr.bf16.mxu0 0
    %206 = vmatpush1.bf16.msra.mxu0 %v193
    %207 = vmatprep.subr.bf16.mxu0 0
    %208 = vmatpush1.bf16.msra.mxu0 %v192
    %209 = vmatprep.subr.bf16.mxu0 0
    %210 = vmatpush1.bf16.msra.mxu0 %v191
    %211 = vmatprep.subr.bf16.mxu0 0
    %212 = vmatpush1.bf16.msra.mxu0 %v190
    %213 = vmatprep.subr.bf16.mxu0 0
    %214 = vmatpush1.bf16.msra.mxu0 %v189
    %215 = vmatprep.subr.bf16.mxu0 0
    %216 = vmatpush1.bf16.msra.mxu0 %v188
    %217 = vmatprep.subr.bf16.mxu0 0
    %218 = vmatpush1.bf16.msra.mxu0 %v187
    %219 = vmatprep.subr.bf16.mxu0 0
    %220 = vmatpush2.bf16.msra.mxu0 0
    %221 = vmatprep.subr.bf16.mxu0 0
    %222 = vmatpush2.bf16.msra.mxu0 0
    %223 = vmatprep.subr.bf16.mxu0 0
    %224 = vmatpush2.bf16.msra.mxu0 0
    %225 = vmatprep.subr.bf16.mxu0 0
    %226 = vmatpush2.bf16.msra.mxu0 0
    %227 = vmatprep.subr.bf16.mxu0 0
    %228 = vmatpush2.bf16.msra.mxu0 0
    %229 = vmatprep.subr.bf16.mxu0 0
    %230 = vmatpush2.bf16.msra.mxu0 0
    %231 = vmatprep.subr.bf16.mxu0 0
    %232 = vmatpush2.bf16.msra.mxu0 0
    %233 = vmatprep.subr.bf16.mxu0 0
    %234 = vmatpush2.bf16.msra.mxu0 0
    %235 = vmatprep.mubr.bf16.mxu0 0
    %236 = vmatmul.mubr.bf16.gmra.mxu0 %v131
    %v237 = vpop.f32.mrf.mxu0
    %v238 = vadd.f32 %v153, %v237
    %v239 = vpop.f32.mrf.mxu0
    %v240 = vpop.f32.mrf.mxu0
    %v241 = vpop.f32.mrf.mxu0
    %242 = vdwg.mxu0
    %vm243 = vcmask 1041408
    %v244 = vsel %vm243, %v238, -inf
    %245 = vmax.xlane.f32.xlu0 %v244
    %v246 = vpop.xlane.xlu0 %245
    %v247 = vsub.f32 %v238, %v246
    %v248 = vmul.f32 %v247, 1.442695
    %v249 = vpow.pop %v248
    %v250 = vsel %vm243, %v249, 0.0
    %251 = vadd.xlane.f32.xlu0 %v250
    %v252 = vpop.xlane.xlu0 %251
    %v253 = vrcp.pop %v252
    %v254 = vmul.f32 %v249, %v253
    %255 = vst [vmem:[#allocation8] sm:$0x3] %v254
    // Predicated region
    $region34: #{tpu_custom_call.1} parent=1 // pred_check
      _
    $region35: #{tpu_custom_call.1} parent=1 // pred_check_branch
      %257 = sbr.rel (0) target = $region37
    $region36: #{tpu_custom_call.1} parent=1 // pred_region
      %s259 = ssub.s32 32, 32
      %260 = vsyncadd [#allocation4], %s259
      %s262 = sshll.u32 [#allocation8], 4
      %s263 = int_to_ptr.vmem [resolvable:$true] %s262
      %265 = dma.vmem_to_hbm [thread:$0]  %s263, 32, %s5, [#allocation4]
    $region37: #{tpu_custom_call.1} parent=1 // pred_fallthru
      _
    // Predicated region
    $region38: #{tpu_custom_call.1} parent=1 // pred_check
      _
    $region39: #{tpu_custom_call.1} parent=1 // pred_check_branch
      %267 = sbr.rel (0) target = $region41
    $region40: #{tpu_custom_call.1} parent=1 // pred_region
      %268 = dma.done [#allocation4], 32
    $region41: #{tpu_custom_call.1} parent=1 // pred_fallthru
      _
    %269 = vsyncpa [#allocation3], 1
    %270 = vsyncpa [#allocation6], 1
    %271 = vsyncpa [#allocation4], 1

</llo_original>
